<compile_context>
chip_gen: v7x
topology: tpu7x:2x2x1
jax: 0.10.0
libtpu: 0.0.40
codegen_flags: <defaults>
</compile_context>

<pallas_src>
import functools

import jax
import jax.numpy as jnp
from jax.experimental import pallas as pl
from jax.experimental.pallas import tpu as pltpu

_BN_EPS = 1e-5
_LANE = 128
_SUBLANE = 8


def _round_up(a, b):
    return (a + b - 1) // b * b


def _vmem_params():
    """Returns (tile budget, vmem_limit_bytes), sized per TPU generation."""
    cap = 64 * 1024 * 1024
    try:
        cap = int(getattr(pltpu.get_tpu_info(), "vmem_capacity_bytes", cap))
    except Exception:
        pass  # no TPU visible at trace time: keep the conservative default
    if cap >= 100 * 1024 * 1024:                 # v5e / v6e: 128 MiB physical
        return 48 * 1024 * 1024, 96 * 1024 * 1024
    return 12 * 1024 * 1024, 28 * 1024 * 1024    # v7x-class: 64 MiB physical


def _pick_tile_n(f, b_pad, budget):
    """Largest matmul batch tile fitting the budget (honest accounting)."""
    # Resident bf16 weight (counted double-buffered; constant index_map so it
    # is DMA'd once) + f32 x tile (dbl-buf) + f32 output tile (dbl-buf) +
    # ~3 live (tn, b_pad) f32 in-kernel temporaries + small rows.
    fixed = 2 * 2 * f * b_pad + 4 * 8 * b_pad
    for tn in (4096, 2048, 1024, 512, 256, 128, 64, 32, 16, 8):
        need = fixed + 2 * 4 * tn * f + (2 + 3) * 4 * tn * b_pad
        if need <= budget:
            return tn
    return _SUBLANE
    # TODO(synk): if the resident weight alone blows the budget (very large F
    # on the 64-MiB-VMEM generation), add an innermost "arbitrary" K-reduction
    # grid axis with a (tn, b_pad) f32 VMEM accumulator instead of collapsing
    # to an 8-row batch tile.


def _pick_tile_elementwise(b_pad, budget):
    """Largest batch tile for the pure-elementwise BN apply pass."""
    for tn in (8192, 4096, 2048, 1024, 512, 256, 128, 64, 32, 16, 8):
        need = 2 * tn * b_pad * (2 + 4) + 4 * 8 * b_pad   # bf16 in, f32 out
        if need <= budget:
            return tn
    return _SUBLANE


# ----------------------------- kernels --------------------------------------


def _linear_kernel(x_ref, w_ref, b_ref, o_ref, *, out_cols):
    x = x_ref[...].astype(w_ref.dtype)          # bf16 cast of the x tile only
    y = jax.lax.dot_general(x, w_ref[...], (((1,), (0,)), ((), ())),
                            preferred_element_type=jnp.float32)
    y = y + b_ref[...]
    o_ref[...] = y[:, :out_cols].astype(o_ref.dtype)


def _fused_linear_bn_kernel(x_ref, w_ref, b_ref, g_ref, be_ref, o_ref, *,
                            n_rows, out_cols):
    # Whole batch in one (full-extent) block -> exact batch statistics here,
    # centered two-pass variance, no y round trip through HBM.
    x = x_ref[...].astype(w_ref.dtype)
    y = jax.lax.dot_general(x, w_ref[...], (((1,), (0,)), ((), ())),
                            preferred_element_type=jnp.float32)
    y = y + b_ref[...]
    inv_n = 1.0 / n_rows
    mu = jnp.sum(y, axis=0, keepdims=True) * inv_n
    d = y - mu
    var = jnp.sum(d * d, axis=0, keepdims=True) * inv_n      # biased variance
    yn = d * jax.lax.rsqrt(var + _BN_EPS)
    o_ref[...] = (g_ref[...] * yn + be_ref[...])[:, :out_cols].astype(o_ref.dtype)


def _linear_stats_kernel(x_ref, w_ref, b_ref, y_ref, st_ref, *,
                         block_n, n_valid):
    # BN pass 1: y = x @ W^T + b per batch tile (stored bf16), plus per-tile
    # partial sum / sum-of-squares of the bias-free matmul output d, written
    # to this step's own (8, B_pad) stats block -> batch axis stays "parallel"
    # (dual-TC on v7x), no sequential accumulator.
    x = x_ref[...].astype(w_ref.dtype)
    d = jax.lax.dot_general(x, w_ref[...], (((1,), (0,)), ((), ())),
                            preferred_element_type=jnp.float32)
    y_ref[...] = (d + b_ref[...]).astype(y_ref.dtype)

    def write_stats(dv):
        s = jnp.sum(dv, axis=0, keepdims=True)                 # (1, B_pad)
        sq = jnp.sum(dv * dv, axis=0, keepdims=True)
        row = jax.lax.broadcasted_iota(jnp.int32, st_ref.shape, 0)
        st_ref[...] = jnp.where(row == 0, s, jnp.where(row == 1, sq, 0.0))

    rem = n_valid % block_n
    if rem == 0:
        write_stats(d)
    else:
        # Only the last (partial) block carries undefined padding rows; gate
        # the iota+select mask to that single step.
        is_last = pl.program_id(0) == pl.num_programs(0) - 1

        @pl.when(is_last)
        def _():
            rows = jax.lax.broadcasted_iota(jnp.int32, d.shape, 0)
            write_stats(jnp.where(rows < rem, d, 0.0))

        @pl.when(jnp.logical_not(is_last))
        def _():
            write_stats(d)


def _bn_apply_kernel(y_ref, scale_ref, shift_ref, o_ref, *, out_cols):
    # BN pass 2: purely elementwise, lane-dense, HBM-bandwidth bound.
    y = y_ref[...].astype(jnp.float32)
    v = y * scale_ref[...] + shift_ref[...]
    o_ref[...] = v[:, :out_cols].astype(o_ref.dtype)


# ----------------------------- wrapper ---------------------------------------


def feat_bottleneck_forward(x, weight, bias, gamma=None, beta=None,
                            btype="ori", *, tile_n=None, use_bf16_matmul=True):
    """feat_bottleneck forward.

    x: (N, F); weight: (B, F) (PyTorch nn.Linear layout); bias/gamma/beta: (B,).
    btype == 'bn' applies training-mode BatchNorm1d (batch stats, biased var).
    """
    n, f = x.shape
    bdim, f_w = weight.shape
    assert f_w == f, "weight must be (bottleneck_dim, feature_dim)"
    out_dtype = x.dtype
    w_dtype = jnp.bfloat16 if use_bf16_matmul else x.dtype

    budget, vmem_limit = _vmem_params()

    # Lane-pad only the bottleneck dim (cheap, amortizable at param-prep time).
    # The batch dim is NOT padded: partial last grid blocks rely on Pallas
    # discarding OOB stores, plus the stats row-mask below.
    b_pad = _round_up(bdim, _LANE)
    if b_pad != bdim:
        weight = jnp.pad(weight, ((0, b_pad - bdim), (0, 0)))
        bias = jnp.pad(bias, (0, b_pad - bdim))
        if gamma is not None:
            gamma = jnp.pad(gamma, (0, b_pad - bdim), constant_values=1.0)
        if beta is not None:
            beta = jnp.pad(beta, (0, b_pad - bdim))

    # One amortized wrapper pass: bf16 cast + transpose -> (F, B_pad).  The
    # kernels then use the canonical ((1,),(0,)) contraction on a resident,
    # already-MXU-native weight tile.
    w_t = weight.astype(w_dtype).T
    bias_row = bias.reshape(1, b_pad).astype(jnp.float32)

    if tile_n is None:
        tn = _pick_tile_n(f, b_pad, budget)
    else:
        tn = max(_SUBLANE, _round_up(int(tile_n), _SUBLANE))

    single_block = n <= tn
    block_n = n if single_block else tn
    grid_n = 1 if single_block else pl.cdiv(n, tn)

    cparams = pltpu.CompilerParams(dimension_semantics=("parallel",),
                                   vmem_limit_bytes=vmem_limit)
    cost = pl.CostEstimate(
        flops=2 * n * f * b_pad,
        bytes_accessed=4 * n * f + 2 * f * b_pad + 4 * n * b_pad,
        transcendentals=b_pad if btype == "bn" else 0)

    x_spec = pl.BlockSpec((block_n, f), lambda i: (i, 0))
    w_spec = pl.BlockSpec((f, b_pad), lambda i: (0, 0))        # resident
    row_spec = pl.BlockSpec((1, b_pad), lambda i: (0, 0))      # resident
    o_spec = pl.BlockSpec((block_n, bdim), lambda i: (i, 0))

    if btype != "bn":
        return pl.pallas_call(
            functools.partial(_linear_kernel, out_cols=bdim),
            out_shape=jax.ShapeDtypeStruct((n, bdim), out_dtype),
            grid=(grid_n,),
            in_specs=[x_spec, w_spec, row_spec],
            out_specs=o_spec,
            compiler_params=cparams,
            cost_estimate=cost,
        )(x, w_t, bias_row)

    gamma_row = gamma.reshape(1, b_pad).astype(jnp.float32)
    beta_row = beta.reshape(1, b_pad).astype(jnp.float32)

    if single_block:
        # Fast path: whole batch in one full-extent block -> fused Linear+BN.
        return pl.pallas_call(
            functools.partial(_fused_linear_bn_kernel, n_rows=n, out_cols=bdim),
            out_shape=jax.ShapeDtypeStruct((n, bdim), out_dtype),
            grid=(1,),
            in_specs=[x_spec, w_spec, row_spec, row_spec, row_spec],
            out_specs=o_spec,
            compiler_params=cparams,
            cost_estimate=cost,
        )(x, w_t, bias_row, gamma_row, beta_row)

    # ---- Tiled BN, pass 1: linear + per-tile partial stats ("parallel"). ----
    y_spec = pl.BlockSpec((block_n, b_pad), lambda i: (i, 0))
    st_spec = pl.BlockSpec((_SUBLANE, b_pad), lambda i: (i, 0))
    y_lin, stats = pl.pallas_call(
        functools.partial(_linear_stats_kernel, block_n=block_n, n_valid=n),
        out_shape=(jax.ShapeDtypeStruct((n, b_pad), jnp.bfloat16),
                   jax.ShapeDtypeStruct((grid_n * _SUBLANE, b_pad), jnp.float32)),
        grid=(grid_n,),
        in_specs=[x_spec, w_spec, row_spec],
        out_specs=(y_spec, st_spec),
        compiler_params=cparams,
        cost_estimate=cost,
    )(x, w_t, bias_row)

    # Tiny cross-tile fold in XLA.  Stats were accumulated on the bias-free
    # matmul output d = x @ W^T (variance is shift-invariant), which keeps the
    # single-pass E[d^2] - E[d]^2 form well-conditioned; accumulation is f32.
    st = stats.reshape(grid_n, _SUBLANE, b_pad)
    sum_d = jnp.sum(st[:, 0, :], axis=0, keepdims=True)
    sum_sq = jnp.sum(st[:, 1, :], axis=0, keepdims=True)
    mean_d = sum_d / n
    mu = mean_d + bias_row
    var = jnp.maximum(sum_sq / n - mean_d * mean_d, 0.0)       # biased variance
    inv_std = jax.lax.rsqrt(var + _BN_EPS)
    scale = gamma_row * inv_std
    shift = beta_row - mu * scale

    # ---- Tiled BN, pass 2: elementwise normalize with its own large tile. ----
    tn2 = tn if tile_n is not None else _pick_tile_elementwise(b_pad, budget)
    block_n2 = n if n <= tn2 else tn2
    grid_n2 = 1 if n <= tn2 else pl.cdiv(n, tn2)
    y_spec2 = pl.BlockSpec((block_n2, b_pad), lambda i: (i, 0))
    o_spec2 = pl.BlockSpec((block_n2, bdim), lambda i: (i, 0))
    return pl.pallas_call(
        functools.partial(_bn_apply_kernel, out_cols=bdim),
        out_shape=jax.ShapeDtypeStruct((n, bdim), out_dtype),
        grid=(grid_n2,),
        in_specs=[y_spec2, row_spec, row_spec],
        out_specs=o_spec2,
        compiler_params=cparams,
        cost_estimate=pl.CostEstimate(flops=2 * n * b_pad,
                                      bytes_accessed=(2 + 4) * n * b_pad,
                                      transcendentals=0),
    )(y_lin, scale, shift)
    # TODO(synk): running_mean/running_var buffer updates of nn.BatchNorm1d
    # (training bookkeeping) are not produced by this forward.


def _init_params(key, feature_dim, bottleneck_dim):
    # Deterministic synthetic init (PyTorch Linear-style uniform bounds).
    kw, kb = jax.random.split(key)
    bound = 1.0 / (feature_dim ** 0.5)
    weight = jax.random.uniform(kw, (bottleneck_dim, feature_dim),
                                jnp.float32, -bound, bound)
    bias = jax.random.uniform(kb, (bottleneck_dim,), jnp.float32, -bound, bound)
    gamma = jnp.ones((bottleneck_dim,), jnp.float32)   # BN affine weight
    beta = jnp.zeros((bottleneck_dim,), jnp.float32)   # BN affine bias
    return weight, bias, gamma, beta


if __name__ == "__main__":
    key = jax.random.PRNGKey(0)
    kx, kp = jax.random.split(key)

    # Small demo shapes: N=20 (not a multiple of 8 -> exercises partial last
    # blocks / stats masking), F=32, B=128 (lane-dense bottleneck).
    N, FEATURE_DIM, BOTTLENECK_DIM = 20, 32, 128
    x = jax.random.normal(kx, (N, FEATURE_DIM), jnp.float32)
    weight, bias, gamma, beta = _init_params(kp, FEATURE_DIM, BOTTLENECK_DIM)

    # type='ori': Linear only — auto tile (single block) and forced tiled grid.
    y_ori = jax.block_until_ready(
        feat_bottleneck_forward(x, weight, bias, gamma, beta, btype="ori"))
    y_ori_tiled = jax.block_until_ready(
        feat_bottleneck_forward(x, weight, bias, gamma, beta, btype="ori",
                                tile_n=8))

    # type='bn': fused single-block fast path and tiled two-pass path.
    y_bn = jax.block_until_ready(
        feat_bottleneck_forward(x, weight, bias, gamma, beta, btype="bn"))
    y_bn_tiled = jax.block_until_ready(
        feat_bottleneck_forward(x, weight, bias, gamma, beta, btype="bn",
                                tile_n=8))

    # Reference in plain JAX (matching the bf16-input / f32-accumulate matmul).
    ref = jnp.dot(x.astype(jnp.bfloat16), weight.T.astype(jnp.bfloat16),
                  preferred_element_type=jnp.float32) + bias
    mu = ref.mean(0, keepdims=True)
    var = ((ref - mu) ** 2).mean(0, keepdims=True)
    ref_bn = gamma * (ref - mu) / jnp.sqrt(var + _BN_EPS) + beta

    assert jnp.allclose(y_ori, ref, atol=2e-3, rtol=2e-3), "linear mismatch"
    assert jnp.allclose(y_ori_tiled, ref, atol=2e-3, rtol=2e-3), \
        "linear (tiled) mismatch"
    assert jnp.allclose(y_bn, ref_bn, atol=2e-2, rtol=2e-2), "bn mismatch"
    assert jnp.allclose(y_bn_tiled, ref_bn, atol=2e-2, rtol=2e-2), \
        "bn (tiled) mismatch"

    print("KERNEL_OK")
</pallas_src>

<mosaic_0001>
module attributes {stable_mosaic.version = 11 : i64} {
  func.func @_linear_kernel(%arg0: i32, %arg1: memref<20x32xf32, #tpu.memory_space<vmem>>, %arg2: memref<32x128xbf16, #tpu.memory_space<vmem>>, %arg3: memref<1x128xf32, #tpu.memory_space<vmem>>, %arg4: memref<20x128xf32, #tpu.memory_space<vmem>>) attributes {dimension_semantics = [#tpu.dimension_semantics<parallel>], iteration_bounds = array<i64: 1>, scalar_prefetch = 0 : i64, scratch_operands = 0 : i64, tpu.core_type = #tpu.core_type<tc>, window_params = [{transform_indices = @transform_0, window_bounds = array<i64: 20, 32>}, {pipeline_mode = #tpu.pipeline_mode<synchronous>, transform_indices = @transform_1, window_bounds = array<i64: 32, 128>}, {pipeline_mode = #tpu.pipeline_mode<synchronous>, transform_indices = @transform_2, window_bounds = array<i64: 1, 128>}, {transform_indices = @transform_3, window_bounds = array<i64: 20, 128>}]} {
    %c0 = arith.constant 0 : index
    %c0_0 = arith.constant 0 : index
    %0 = vector.load %arg1[%c0, %c0_0] : memref<20x32xf32, #tpu.memory_space<vmem>>, vector<20x32xf32>
    %1 = arith.truncf %0 : vector<20x32xf32> to vector<20x32xbf16>
    %c0_1 = arith.constant 0 : index
    %c0_2 = arith.constant 0 : index
    %2 = vector.load %arg2[%c0_1, %c0_2] : memref<32x128xbf16, #tpu.memory_space<vmem>>, vector<32x128xbf16>
    %cst = arith.constant dense<0.000000e+00> : vector<20x128xf32>
    %3 = tpu.matmul %1, %2, %cst {dimension_numbers = #tpu.dot_dimension_numbers<[1], [0], [0], [1], [0, 0, 1, 1], [], []>} : vector<20x32xbf16>, vector<32x128xbf16>, vector<20x128xf32> -> vector<20x128xf32>
    %c0_3 = arith.constant 0 : index
    %c0_4 = arith.constant 0 : index
    %4 = vector.load %arg3[%c0_3, %c0_4] : memref<1x128xf32, #tpu.memory_space<vmem>>, vector<1x128xf32>
    %5 = vector.broadcast %4 : vector<1x128xf32> to vector<20x128xf32>
    %6 = arith.addf %3, %5 : vector<20x128xf32>
    %c0_5 = arith.constant 0 : index
    %c0_6 = arith.constant 0 : index
    %7 = vector.load %arg4[%c0_5, %c0_6] : memref<20x128xf32, #tpu.memory_space<vmem>>, vector<20x128xf32>
    tpu.vector_store %arg4[%c0_5, %c0_6], %6 {strides = array<i32>} : memref<20x128xf32, #tpu.memory_space<vmem>>, vector<20x128xf32>,
    return
  }
  func.func @transform_0(%arg0: i32) -> (i32, i32) {
    %c0_i32 = arith.constant 0 : i32
    %c0_i32_0 = arith.constant 0 : i32
    return %arg0, %c0_i32 : i32, i32
  }
  func.func @transform_1(%arg0: i32) -> (i32, i32) {
    %c0_i32 = arith.constant 0 : i32
    %c0_i32_0 = arith.constant 0 : i32
    %c0_i32_1 = arith.constant 0 : i32
    return %c0_i32, %c0_i32_0 : i32, i32
  }
  func.func @transform_2(%arg0: i32) -> (i32, i32) {
    %c0_i32 = arith.constant 0 : i32
    %c0_i32_0 = arith.constant 0 : i32
    %c0_i32_1 = arith.constant 0 : i32
    return %c0_i32, %c0_i32_0 : i32, i32
  }
  func.func @transform_3(%arg0: i32) -> (i32, i32) {
    %c0_i32 = arith.constant 0 : i32
    %c0_i32_0 = arith.constant 0 : i32
    return %arg0, %c0_i32 : i32, i32
  }
}

</mosaic_0001>

<llo_original>
// kernel: tpu_custom_call.1
$region0: #{tpu_custom_call.1}
  #allocation0 [shape = 'u32[]', space=smem, size = 0x4, offset = 0x4, fixed_abs, tag = 'smem constant byte address 0x4 - core index']
  #allocation1 [shape = 'u32[144,128]{1,0:T(1,128)}', space=vmem, size = 0x12000, scoped, tag = 'internal scratch']
  %s0 = inlined_call_operand.hbm [shape: f32[20,32], index: 0, kind: input, shape index: {}]
  %s1 = inlined_call_operand.hbm [shape: bf16[32,128], index: 1, kind: input, shape index: {}]
  %s2 = inlined_call_operand.vmem [shape: f32[1,128], index: 2, kind: input, shape index: {}]
  %s3 = inlined_call_operand.hbm [shape: f32[20,128], index: 3, kind: output, shape index: {}]
  %s4 = sld [smem:[#allocation0]]
  $region30: #{tpu_custom_call.1} parent=0
    _
  %s6 = ssub.s32 1, %s4
  %s7 = scalar_select 0, %s6, %s4
  $region1: #{tpu_custom_call.1} parent=0
    #allocation2 [shape = 'u8[12288]{0}', space=vmem, size = 0x3000, scoped, tag = 'input window, operand 0, single buffered']
    #allocation3 [shape = 's32[1]{0}', space=sflag, size = 0x4, scoped, tag = 'scoped memory for tpu_custom_call.1']
    #allocation4 [shape = 's32[1]{0}', space=sflag, size = 0x4, scoped, tag = 'scoped memory for tpu_custom_call.1']
    #allocation5 [shape = 'u8[8192]{0}', space=vmem, size = 0x2000, scoped, tag = 'input window, operand 1, single buffered']
    #allocation6 [shape = 's32[1]{0}', space=sflag, size = 0x4, scoped, tag = 'scoped memory for tpu_custom_call.1']
    #allocation7 [shape = 'u8[12288]{0}', space=vmem, size = 0x3000, scoped, tag = 'output window, operand 0, single buffered']
    %8 = vsyncpa [#allocation3], 0
    %9 = vsyncpa [#allocation6], 0
    %10 = vsyncpa [#allocation4], 0
    // Predicated region
    $region2: #{tpu_custom_call.1} parent=1 // pred_check
      _
    $region3: #{tpu_custom_call.1} parent=1 // pred_check_branch
      %12 = sbr.rel (0) target = $region5
    $region4: #{tpu_custom_call.1} parent=1 // pred_region
      %s14 = ssub.s32 384, 384
      %15 = vsyncadd [#allocation3], %s14
      %s16 = sshll.u32 [#allocation2], 4
      %s17 = int_to_ptr.vmem [resolvable:$true] %s16
      %22 = dma.hbm_to_vmem [thread:$0]  %s0, 384, %s17, [#allocation3], 128, 128, 8
    $region5: #{tpu_custom_call.1} parent=1 // pred_fallthru
      _
    // Predicated region
    $region6: #{tpu_custom_call.1} parent=1 // pred_check
      _
    $region7: #{tpu_custom_call.1} parent=1 // pred_check_branch
      %24 = sbr.rel (0) target = $region9
    $region8: #{tpu_custom_call.1} parent=1 // pred_region
      %s26 = ssub.s32 256, 256
      %27 = vsyncadd [#allocation6], %s26
      %s28 = sshll.u32 [#allocation5], 4
      %s29 = int_to_ptr.vmem [resolvable:$true] %s28
      %34 = dma.hbm_to_vmem [thread:$0]  %s1, 256, %s29, [#allocation6], 64, 64, 4
    $region9: #{tpu_custom_call.1} parent=1 // pred_fallthru
      _
    // Predicated region
    $region10: #{tpu_custom_call.1} parent=1 // pred_check
      _
    $region11: #{tpu_custom_call.1} parent=1 // pred_check_branch
      %36 = sbr.rel (0) target = $region13
    $region12: #{tpu_custom_call.1} parent=1 // pred_region
      _
    $region13: #{tpu_custom_call.1} parent=1 // pred_fallthru
      _
    // Predicated region
    $region14: #{tpu_custom_call.1} parent=1 // pred_check
      _
    $region15: #{tpu_custom_call.1} parent=1 // pred_check_branch
      %38 = sbr.rel (0) target = $region17
    $region16: #{tpu_custom_call.1} parent=1 // pred_region
      %39 = dma.done [#allocation3], 384
    $region17: #{tpu_custom_call.1} parent=1 // pred_fallthru
      _
    // Predicated region
    $region18: #{tpu_custom_call.1} parent=1 // pred_check
      _
    $region19: #{tpu_custom_call.1} parent=1 // pred_check_branch
      %41 = sbr.rel (0) target = $region21
    $region20: #{tpu_custom_call.1} parent=1 // pred_region
      %42 = dma.done [#allocation6], 256
    $region21: #{tpu_custom_call.1} parent=1 // pred_fallthru
      _
    %v44 = vld [vmem:[#allocation2] sm:$0xff]
    %v45 = vld [vmem:[#allocation2 + $0x8] sm:$0xff]
    %v46 = vld [vmem:[#allocation2 + $0x10] sm:$0xf]
    %v47 = vpack.c.bf16 %v45, %v44
    %v48 = vpack.c.bf16 %v46, %v46
    %v49 = vld [vmem:[#allocation5] sm:$0xf]
    %v50 = vld [vmem:[#allocation5 + $0x4] sm:$0xf]
    %v51 = vld [vmem:[#allocation5 + $0x8] sm:$0xf]
    %v52 = vld [vmem:[#allocation5 + $0xc] sm:$0xf]
    %v53 = vld [vmem:[%s2] sm:$0x1]
    %v55 = vlaneseq
    %v56 = vshrl.u32 %v55, 7
    %v57 = vsub.s32 0, %v56
    %v58 = vrot.slane %v53, %v57
    %v64 = vunpack.c.l.b16 %v49
    %v65 = vunpack.c.l.b16 %v50
    %v66 = vunpack.c.l.b16 %v51
    %v67 = vunpack.c.l.b16 %v52
    %v68 = vpack.c.b16 %v65, %v64
    %v69 = vpack.c.b16 %v67, %v66
    %vm72 = vcmask 261120
    %v74 = vsel %vm72, %v47, 0
    %v77 = vsel %vm72, %v48, 0
    %79 = vmatprep.subr.bf16.mxu0 0
    %80 = vmatpush1.bf16.msra.mxu0 %v68
    %81 = vmatprep.subr.bf16.mxu0 0
    %82 = vmatpush1.bf16.msra.mxu0 %v69
    %83 = vmatprep.subr.bf16.mxu0 0
    %84 = vmatpush1.bf16.msra.mxu0 0
    %85 = vmatprep.subr.bf16.mxu0 0
    %86 = vmatpush1.bf16.msra.mxu0 0
    %87 = vmatprep.subr.bf16.mxu0 0
    %88 = vmatpush1.bf16.msra.mxu0 0
    %89 = vmatprep.subr.bf16.mxu0 0
    %90 = vmatpush1.bf16.msra.mxu0 0
    %91 = vmatprep.subr.bf16.mxu0 0
    %92 = vmatpush1.bf16.msra.mxu0 0
    %93 = vmatprep.subr.bf16.mxu0 0
    %94 = vmatpush1.bf16.msra.mxu0 0
    %95 = vmatprep.subr.bf16.mxu0 0
    %96 = vmatpush1.bf16.msra.mxu0 0
    %97 = vmatprep.subr.bf16.mxu0 0
    %98 = vmatpush1.bf16.msra.mxu0 0
    %99 = vmatprep.subr.bf16.mxu0 0
    %100 = vmatpush1.bf16.msra.mxu0 0
    %101 = vmatprep.subr.bf16.mxu0 0
    %102 = vmatpush1.bf16.msra.mxu0 0
    %103 = vmatprep.subr.bf16.mxu0 0
    %104 = vmatpush1.bf16.msra.mxu0 0
    %105 = vmatprep.subr.bf16.mxu0 0
    %106 = vmatpush1.bf16.msra.mxu0 0
    %107 = vmatprep.subr.bf16.mxu0 0
    %108 = vmatpush1.bf16.msra.mxu0 0
    %109 = vmatprep.subr.bf16.mxu0 0
    %110 = vmatpush1.bf16.msra.mxu0 0
    %111 = vmatprep.mubr.bf16.mxu0 0
    %112 = vmatmul.mubr.bf16.gmra.mrb[0].mxu0 %v74
    %v113 = vpop.f32.mrb[0].mxu0
    %v114 = vadd.f32 %v58, %v113
    %v115 = vpop.f32.mrb[0].mxu0
    %v116 = vpop.f32.mrb[0].mxu0
    %v117 = vadd.f32 %v58, %v116
    %v118 = vpop.f32.mrb[0].mxu0
    %119 = vmatprep.mubr.bf16.mxu0 0
    %120 = vmatmul.mubr.bf16.gmra.mrb[0].mxu0 %v77
    %v121 = vpop.f32.mrb[0].mxu0
    %v122 = vadd.f32 %v58, %v121
    %v123 = vpop.f32.mrb[0].mxu0
    %v124 = vpop.f32.mrb[0].mxu0
    %v125 = vpop.f32.mrb[0].mxu0
    %126 = vdwg.mxu0
    %127 = vst [vmem:[#allocation7] sm:$0xff] %v114
    %128 = vst [vmem:[#allocation7 + $0x8] sm:$0xff] %v117
    %129 = vst [vmem:[#allocation7 + $0x10] sm:$0xf] %v122
    // Predicated region
    $region22: #{tpu_custom_call.1} parent=1 // pred_check
      _
    $region23: #{tpu_custom_call.1} parent=1 // pred_check_branch
      %131 = sbr.rel (0) target = $region25
    $region24: #{tpu_custom_call.1} parent=1 // pred_region
      %s133 = ssub.s32 384, 384
      %134 = vsyncadd [#allocation4], %s133
      %s135 = sshll.u32 [#allocation7], 4
      %s136 = int_to_ptr.vmem [resolvable:$true] %s135
      %141 = dma.vmem_to_hbm [thread:$0]  %s136, 384, %s3, [#allocation4], 128, 128, 8
    $region25: #{tpu_custom_call.1} parent=1 // pred_fallthru
      _
    // Predicated region
    $region26: #{tpu_custom_call.1} parent=1 // pred_check
      _
    $region27: #{tpu_custom_call.1} parent=1 // pred_check_branch
      %143 = sbr.rel (0) target = $region29
    $region28: #{tpu_custom_call.1} parent=1 // pred_region
      %144 = dma.done [#allocation4], 384
    $region29: #{tpu_custom_call.1} parent=1 // pred_fallthru
      _
    %145 = vsyncpa [#allocation3], 1
    %146 = vsyncpa [#allocation6], 1
    %147 = vsyncpa [#allocation4], 1

</llo_original>
